<compile_context>
chip_gen: v6e
topology: v6e:2x2x1
jax: 0.10.0
libtpu: 0.0.40
codegen_flags: <defaults>
</compile_context>

<pallas_src>
import functools

import jax
import jax.numpy as jnp
from jax.experimental import pallas as pl
from jax.experimental.pallas import tpu as pltpu

EPS = 1e-6

# model hyper-parameters (consistent with the module's constructor)
D_IN_X = 8          # d_in_x
D_IN_Y = 1          # d_in_y
D_OUT = 1           # d_out
LAYERS_X = [32, 32]
LAYERS = [32, 32]
BATCH = 16

# lane-packing factor: 4 batch rows per 128-lane vreg row (feature width is 32)
P = 4
DX = D_IN_X * P            # 32  : packed x width
DH = LAYERS_X[0] * P       # 128 : packed hidden width

# Row offsets inside the packed weight slab (every segment starts 8-row aligned
# so all in-kernel slices are sublane-aligned loads).
OFF_W0 = 0                  # (DX, DH)  block-diag w0
OFF_B0 = OFF_W0 + DX        # (1, DH)   tiled b0
OFF_W1 = OFF_B0 + 8         # (DH, DH)  block-diag w1
OFF_B1 = OFF_W1 + DH        # (1, DH)   tiled b1
OFF_PW = OFF_B1 + 8         # (8, DH)   block-diag pw**2 (rows P..7 exact zeros)
OFF_MB = OFF_PW + 8         # (1, DH)   tiled [pos_bias | linear_bias]
OFF_MW = OFF_MB + 8         # (DH, DH)  block-diag zero-padded mixed linear weight
OFF_W2 = OFF_MW + DH        # (DH, DH)  block-diag w2**2
OFF_B2 = OFF_W2 + DH        # (1, DH)   tiled b2
SLAB_ROWS = OFF_B2 + 8      # 456


def _round_up(n, m):
    return ((n + m - 1) // m) * m


def _cdiv(a, b):
    return (a + b - 1) // b


def _block_diag(w, p=P):
    """(din, dout) -> (p*din, p*dout) block-diagonal with p exact-zero off-blocks."""
    z = jnp.zeros_like(w)
    return jnp.concatenate(
        [jnp.concatenate([w if j == k else z for j in range(p)], axis=1)
         for k in range(p)], axis=0)


def _pad_rows(a, rows):
    return jnp.pad(a, ((0, rows - a.shape[0]), (0, 0)))


def _vmem_limit_bytes():
    """Generation-aware scoped-VMEM limit: ~3/4 of capacity, clamped to [32,100] MiB.
    v5e/v6e (128 MiB) -> 96 MiB, v7x (64 MiB) -> 48 MiB."""
    cap = 64 * 1024 * 1024
    try:
        info = pltpu.get_tpu_info()
        cap = int(getattr(info, "vmem_capacity_bytes", cap))
    except Exception:
        pass
    return int(min(max(cap * 3 // 4, 32 * 1024 * 1024), 100 * 1024 * 1024))


def _survival_kernel(x_ref, y_ref, ws_ref, wl_ref, out_ref):
    rows = out_ref.shape[0]

    x = x_ref[...]        # (rows, 32) : 4 batch rows lane-packed per vreg row
    y = y_ref[...]        # (rows, 8)  : 4 event times (lanes 4..7 are zero pad)

    # static, aligned views into the VMEM-resident weight slabs
    w0 = ws_ref[OFF_W0:OFF_W0 + DX, :]
    b0 = ws_ref[OFF_B0:OFF_B0 + 1, :]
    w1 = ws_ref[OFF_W1:OFF_W1 + DH, :]
    b1 = ws_ref[OFF_B1:OFF_B1 + 1, :]
    pw2 = ws_ref[OFF_PW:OFF_PW + 8, :]
    mixb = ws_ref[OFF_MB:OFF_MB + 1, :]
    mw = ws_ref[OFF_MW:OFF_MW + DH, :]
    w2 = ws_ref[OFF_W2:OFF_W2 + DH, :]
    b2 = ws_ref[OFF_B2:OFF_B2 + 1, :]
    wl = wl_ref[0:DH, :]
    bl = wl_ref[DH:DH + 1, :]

    # ---------------- covariate_net (multi_input_Sequential_res_net) --------
    h0 = jnp.tanh(jnp.dot(x, w0, preferred_element_type=jnp.float32) + b0)
    h1 = jnp.tanh(jnp.dot(h0, w1, preferred_element_type=jnp.float32) + b1)
    x_cov = h0 + h1                       # residual add (32 == 32)

    # ---------------- mixed_layer_2 ------------------------------------------
    # Zero-padded block-diag weights + fused bias reproduce the torch.cat of the
    # bounded/regular halves exactly (adding exact zeros is bitwise identical).
    regular = jnp.dot(x_cov, mw, preferred_element_type=jnp.float32) + mixb
    bounded = jnp.dot(y, pw2, preferred_element_type=jnp.float32)
    bounded_fwd = jnp.dot(y + EPS, pw2, preferred_element_type=jnp.float32)
    z = jnp.tanh(bounded + regular)
    z_fwd = jnp.tanh(bounded_fwd + regular)

    # ------------- fused y / y+eps tail: doubled-M, lane-dense matmuls -------
    za = jnp.concatenate([z, z_fwd], axis=0)                  # (2*rows, 128)
    za1 = jnp.tanh(jnp.dot(za, w2, preferred_element_type=jnp.float32) + b2)
    za = za + za1                                             # residual add (32 == 32)
    h_all = jnp.dot(za, wl, preferred_element_type=jnp.float32) + bl   # (2*rows, P*D_OUT)

    F = jax.nn.sigmoid(h_all[:rows, :])
    F_fwd = jax.nn.sigmoid(h_all[rows:, :])
    out_ref[...] = (F_fwd - F) / EPS                          # density estimate f


def survival_net_forward(x_cov, y, params, tile=4096):
    """params = (w0, b0, w1, b1, pw, pb, mw, mb, w2, b2, wl, bl); weights stored
    as (d_in, d_out) (torch nn.Linear weights transposed), biases as (1, d)."""
    (w0, b0, w1, b1, pw, pb, mw, mb, w2, b2, wl, bl) = params
    n = x_cov.shape[0]
    d_half = pw.shape[1]                  # layers[0] // 2

    # --- hoisted parameter prep: bounding op (W**2), concat elimination, and
    #     block-diagonal lane packing; done once per call, outside the grid ----
    pw2_pad = jnp.concatenate([pw * pw, jnp.zeros((1, d_half), jnp.float32)], axis=1)
    mix_b = jnp.concatenate([pb, mb], axis=1)
    mw_pad = jnp.concatenate(
        [jnp.zeros((mw.shape[0], d_half), jnp.float32), mw], axis=1)

    wslab = jnp.concatenate([
        _block_diag(w0),                              # (32, 128)
        _pad_rows(jnp.tile(b0, (1, P)), 8),           # (8, 128)
        _block_diag(w1),                              # (128, 128)
        _pad_rows(jnp.tile(b1, (1, P)), 8),           # (8, 128)
        _pad_rows(_block_diag(pw2_pad), 8),           # (8, 128)
        _pad_rows(jnp.tile(mix_b, (1, P)), 8),        # (8, 128)
        _block_diag(mw_pad),                          # (128, 128)
        _block_diag(w2 * w2),                         # (128, 128)
        _pad_rows(jnp.tile(b2, (1, P)), 8),           # (8, 128)
    ], axis=0)                                        # (SLAB_ROWS, DH) = (456, 128)
    wl_slab = jnp.concatenate(
        [_block_diag(wl * wl), jnp.tile(bl, (1, P))], axis=0)   # (129, P*D_OUT)

    # --- batch packing (4 rows / vreg row) and tile selection -----------------
    n_rows = _cdiv(n, P)
    tile_rows = max(tile // P, 8)
    if n_rows > 8:
        # guarantee >= 2 grid steps so both v7x TensorCores get work
        tile_rows = min(tile_rows, _round_up(_cdiv(n_rows, 2), 8))
    tile_rows = min(tile_rows, _round_up(n_rows, 8))
    tile_rows = _round_up(tile_rows, 8)
    n_rows_pad = _round_up(n_rows, tile_rows)
    n_pad = n_rows_pad * P

    x_p = jnp.pad(x_cov, ((0, n_pad - n), (0, 0))).reshape(n_rows_pad, P * D_IN_X)
    y_p = jnp.pad(y, ((0, n_pad - n), (0, 0))).reshape(n_rows_pad, P)
    y_p = jnp.pad(y_p, ((0, 0), (0, 8 - P)))          # pad K to 8 for the bounded matmul

    out = pl.pallas_call(
        _survival_kernel,
        out_shape=jax.ShapeDtypeStruct((n_rows_pad, P * D_OUT), jnp.float32),
        grid_spec=pltpu.PrefetchScalarGridSpec(
            num_scalar_prefetch=0,
            grid=(n_rows_pad // tile_rows,),
            in_specs=[
                pl.BlockSpec((tile_rows, P * D_IN_X), lambda i: (i, 0)),   # x packed
                pl.BlockSpec((tile_rows, 8), lambda i: (i, 0)),            # y packed
                pl.BlockSpec(wslab.shape, lambda i: (0, 0)),               # weight slab
                pl.BlockSpec(wl_slab.shape, lambda i: (0, 0)),             # last-layer slab
            ],
            out_specs=pl.BlockSpec((tile_rows, P * D_OUT), lambda i: (i, 0)),
        ),
        compiler_params=pltpu.CompilerParams(
            dimension_semantics=("parallel",),        # shard batch across TCs (v7x)
            vmem_limit_bytes=_vmem_limit_bytes(),     # generation-aware limit
        ),
    )(x_p, y_p, wslab, wl_slab)

    # (N/4, 4) -> (N, 1): free row-major unpacking of the lane-packed rows
    return out.reshape(n_pad, D_OUT)[:n]


def make_params(key):
    """Deterministic standard-normal init (mirrors torch parameter shapes)."""
    ks = jax.random.split(key, 12)
    d_half = LAYERS[0] // 2  # 16
    w0 = jax.random.normal(ks[0], (D_IN_X, LAYERS_X[0]), jnp.float32) * 0.5
    b0 = jax.random.normal(ks[1], (1, LAYERS_X[0]), jnp.float32) * 0.5
    w1 = jax.random.normal(ks[2], (LAYERS_X[0], LAYERS_X[1]), jnp.float32) * 0.5
    b1 = jax.random.normal(ks[3], (1, LAYERS_X[1]), jnp.float32) * 0.5
    pw = jax.random.normal(ks[4], (D_IN_Y, d_half), jnp.float32) * 0.5
    pb = jax.random.normal(ks[5], (1, d_half), jnp.float32) * 0.5
    mw = jax.random.normal(ks[6], (LAYERS_X[-1], d_half), jnp.float32) * 0.5
    mb = jax.random.normal(ks[7], (1, d_half), jnp.float32) * 0.5
    w2 = jax.random.normal(ks[8], (LAYERS[0], LAYERS[1]), jnp.float32) * 0.5
    b2 = jax.random.normal(ks[9], (1, LAYERS[1]), jnp.float32) * 0.5
    wl = jax.random.normal(ks[10], (LAYERS[-1], D_OUT), jnp.float32) * 0.5
    bl = jax.random.normal(ks[11], (1, D_OUT), jnp.float32) * 0.5
    return (w0, b0, w1, b1, pw, pb, mw, mb, w2, b2, wl, bl)


def reference_forward(x_cov, y, params):
    """Pure-JAX replica of the PyTorch forward (true-f32 matmuls)."""
    (w0, b0, w1, b1, pw, pb, mw, mb, w2, b2, wl, bl) = params
    dot = functools.partial(jnp.dot, precision=jax.lax.Precision.HIGHEST)
    h0 = jnp.tanh(dot(x_cov, w0) + b0)
    h1 = jnp.tanh(dot(h0, w1) + b1)
    xc = h0 + h1

    def middle(y_in):
        bounded = dot(y_in, pw ** 2) + pb
        regular = dot(xc, mw) + mb
        z = jnp.tanh(jnp.concatenate([bounded, regular], axis=1))
        z1 = jnp.tanh(dot(z, w2 ** 2) + b2)
        z = z + z1
        return dot(z, wl ** 2) + bl

    F = jax.nn.sigmoid(middle(y))
    F_fwd = jax.nn.sigmoid(middle(y + EPS))
    return (F_fwd - F) / EPS


if __name__ == "__main__":
    key = jax.random.PRNGKey(0)
    k_x, k_y, k_p = jax.random.split(key, 3)

    x_cov = jax.random.normal(k_x, (BATCH, D_IN_X), jnp.float32)
    y = jax.random.uniform(k_y, (BATCH, D_IN_Y), jnp.float32)   # event times >= 0
    params = make_params(k_p)

    # NOTE: dropout (p=0.9) is identity in eval mode; x_cat=[] so no embeddings.
    out = jax.jit(survival_net_forward)(x_cov, y, params)
    out = jax.block_until_ready(out)
    ref = reference_forward(x_cov, y, params)

    assert out.shape == (BATCH, D_OUT)
    assert bool(jnp.all(jnp.isfinite(out)))
    # (F_fwd - F) is quantized at the float32-ulp level (~6e-8 for F in 0.1..1);
    # the module divides by eps=1e-6, amplifying that ulp noise by 1e6.  So the
    # kernel-vs-reference check is done at the pre-division scale, where a few
    # tens of ulps of the sigmoid output is the meaningful agreement criterion.
    err = float(jnp.max(jnp.abs(out - ref))) * EPS
    assert err < 2e-6, (err, out, ref)

    print("KERNEL_OK")
</pallas_src>

<mosaic_0001>
module attributes {stable_mosaic.version = 11 : i64} {
  func.func @_survival_kernel(%arg0: i32, %arg1: memref<8x32xf32, #tpu.memory_space<vmem>>, %arg2: memref<8x8xf32, #tpu.memory_space<vmem>>, %arg3: memref<456x128xf32, #tpu.memory_space<vmem>>, %arg4: memref<129x4xf32, #tpu.memory_space<vmem>>, %arg5: memref<8x4xf32, #tpu.memory_space<vmem>>) attributes {dimension_semantics = [#tpu.dimension_semantics<parallel>], iteration_bounds = array<i64: 1>, scalar_prefetch = 0 : i64, scratch_operands = 0 : i64, tpu.core_type = #tpu.core_type<tc>, window_params = [{transform_indices = @transform_0, window_bounds = array<i64: 8, 32>}, {transform_indices = @transform_1, window_bounds = array<i64: 8, 8>}, {pipeline_mode = #tpu.pipeline_mode<synchronous>, transform_indices = @transform_2, window_bounds = array<i64: 456, 128>}, {pipeline_mode = #tpu.pipeline_mode<synchronous>, transform_indices = @transform_3, window_bounds = array<i64: 129, 4>}, {transform_indices = @transform_4, window_bounds = array<i64: 8, 4>}]} {
    %c0 = arith.constant 0 : index
    %c0_0 = arith.constant 0 : index
    %0 = vector.load %arg1[%c0, %c0_0] : memref<8x32xf32, #tpu.memory_space<vmem>>, vector<8x32xf32>
    %c0_1 = arith.constant 0 : index
    %c0_2 = arith.constant 0 : index
    %1 = vector.load %arg2[%c0_1, %c0_2] : memref<8x8xf32, #tpu.memory_space<vmem>>, vector<8x8xf32>
    %c0_3 = arith.constant 0 : index
    %c0_4 = arith.constant 0 : index
    %2 = vector.load %arg3[%c0_3, %c0_4] : memref<456x128xf32, #tpu.memory_space<vmem>>, vector<32x128xf32>
    %c32 = arith.constant 32 : index
    %c0_5 = arith.constant 0 : index
    %3 = vector.load %arg3[%c32, %c0_5] : memref<456x128xf32, #tpu.memory_space<vmem>>, vector<1x128xf32>
    %c40 = arith.constant 40 : index
    %c0_6 = arith.constant 0 : index
    %4 = vector.load %arg3[%c40, %c0_6] : memref<456x128xf32, #tpu.memory_space<vmem>>, vector<128x128xf32>
    %c168 = arith.constant 168 : index
    %c0_7 = arith.constant 0 : index
    %5 = vector.load %arg3[%c168, %c0_7] : memref<456x128xf32, #tpu.memory_space<vmem>>, vector<1x128xf32>
    %c176 = arith.constant 176 : index
    %c0_8 = arith.constant 0 : index
    %6 = vector.load %arg3[%c176, %c0_8] : memref<456x128xf32, #tpu.memory_space<vmem>>, vector<8x128xf32>
    %c184 = arith.constant 184 : index
    %c0_9 = arith.constant 0 : index
    %7 = vector.load %arg3[%c184, %c0_9] : memref<456x128xf32, #tpu.memory_space<vmem>>, vector<1x128xf32>
    %c192 = arith.constant 192 : index
    %c0_10 = arith.constant 0 : index
    %8 = vector.load %arg3[%c192, %c0_10] : memref<456x128xf32, #tpu.memory_space<vmem>>, vector<128x128xf32>
    %c320 = arith.constant 320 : index
    %c0_11 = arith.constant 0 : index
    %9 = vector.load %arg3[%c320, %c0_11] : memref<456x128xf32, #tpu.memory_space<vmem>>, vector<128x128xf32>
    %c448 = arith.constant 448 : index
    %c0_12 = arith.constant 0 : index
    %10 = vector.load %arg3[%c448, %c0_12] : memref<456x128xf32, #tpu.memory_space<vmem>>, vector<1x128xf32>
    %c0_13 = arith.constant 0 : index
    %c0_14 = arith.constant 0 : index
    %11 = vector.load %arg4[%c0_13, %c0_14] : memref<129x4xf32, #tpu.memory_space<vmem>>, vector<128x4xf32>
    %c128 = arith.constant 128 : index
    %c0_15 = arith.constant 0 : index
    %12 = vector.load %arg4[%c128, %c0_15] : memref<129x4xf32, #tpu.memory_space<vmem>>, vector<1x4xf32>
    %cst = arith.constant dense<0.000000e+00> : vector<8x128xf32>
    %13 = tpu.matmul %0, %2, %cst {dimension_numbers = #tpu.dot_dimension_numbers<[1], [0], [0], [1], [0, 0, 1, 1], [], []>} : vector<8x32xf32>, vector<32x128xf32>, vector<8x128xf32> -> vector<8x128xf32>
    %14 = vector.broadcast %3 : vector<1x128xf32> to vector<8x128xf32>
    %15 = arith.addf %13, %14 : vector<8x128xf32>
    %16 = math.tanh %15 : vector<8x128xf32>
    %cst_16 = arith.constant dense<0.000000e+00> : vector<8x128xf32>
    %17 = tpu.matmul %16, %4, %cst_16 {dimension_numbers = #tpu.dot_dimension_numbers<[1], [0], [0], [1], [0, 0, 1, 1], [], []>} : vector<8x128xf32>, vector<128x128xf32>, vector<8x128xf32> -> vector<8x128xf32>
    %18 = vector.broadcast %5 : vector<1x128xf32> to vector<8x128xf32>
    %19 = arith.addf %17, %18 : vector<8x128xf32>
    %20 = math.tanh %19 : vector<8x128xf32>
    %21 = arith.addf %16, %20 : vector<8x128xf32>
    %cst_17 = arith.constant dense<0.000000e+00> : vector<8x128xf32>
    %22 = tpu.matmul %21, %8, %cst_17 {dimension_numbers = #tpu.dot_dimension_numbers<[1], [0], [0], [1], [0, 0, 1, 1], [], []>} : vector<8x128xf32>, vector<128x128xf32>, vector<8x128xf32> -> vector<8x128xf32>
    %23 = vector.broadcast %7 : vector<1x128xf32> to vector<8x128xf32>
    %24 = arith.addf %22, %23 : vector<8x128xf32>
    %cst_18 = arith.constant dense<0.000000e+00> : vector<8x128xf32>
    %25 = tpu.matmul %1, %6, %cst_18 {dimension_numbers = #tpu.dot_dimension_numbers<[1], [0], [0], [1], [0, 0, 1, 1], [], []>} : vector<8x8xf32>, vector<8x128xf32>, vector<8x128xf32> -> vector<8x128xf32>
    %cst_19 = arith.constant 9.99999997E-7 : f32
    %26 = vector.broadcast %cst_19 : f32 to vector<8x8xf32>
    %27 = arith.addf %1, %26 : vector<8x8xf32>
    %cst_20 = arith.constant dense<0.000000e+00> : vector<8x128xf32>
    %28 = tpu.matmul %27, %6, %cst_20 {dimension_numbers = #tpu.dot_dimension_numbers<[1], [0], [0], [1], [0, 0, 1, 1], [], []>} : vector<8x8xf32>, vector<8x128xf32>, vector<8x128xf32> -> vector<8x128xf32>
    %29 = arith.addf %25, %24 : vector<8x128xf32>
    %30 = math.tanh %29 : vector<8x128xf32>
    %31 = arith.addf %28, %24 : vector<8x128xf32>
    %32 = math.tanh %31 : vector<8x128xf32>
    %33 = tpu.concatenate %30, %32 in 0 : vector<8x128xf32>, vector<8x128xf32> -> vector<16x128xf32>
    %cst_21 = arith.constant dense<0.000000e+00> : vector<16x128xf32>
    %34 = tpu.matmul %33, %9, %cst_21 {dimension_numbers = #tpu.dot_dimension_numbers<[1], [0], [0], [1], [0, 0, 1, 1], [], []>} : vector<16x128xf32>, vector<128x128xf32>, vector<16x128xf32> -> vector<16x128xf32>
    %35 = vector.broadcast %10 : vector<1x128xf32> to vector<16x128xf32>
    %36 = arith.addf %34, %35 : vector<16x128xf32>
    %37 = math.tanh %36 : vector<16x128xf32>
    %38 = arith.addf %33, %37 : vector<16x128xf32>
    %cst_22 = arith.constant dense<0.000000e+00> : vector<16x4xf32>
    %39 = tpu.matmul %38, %11, %cst_22 {dimension_numbers = #tpu.dot_dimension_numbers<[1], [0], [0], [1], [0, 0, 1, 1], [], []>} : vector<16x128xf32>, vector<128x4xf32>, vector<16x4xf32> -> vector<16x4xf32>
    %40 = vector.broadcast %12 : vector<1x4xf32> to vector<16x4xf32>
    %41 = arith.addf %39, %40 : vector<16x4xf32>
    %42 = vector.extract_strided_slice %41 {offsets = [0, 0], sizes = [8, 4], strides = [1, 1]} : vector<16x4xf32> to vector<8x4xf32>
    %43 = arith.negf %42 : vector<8x4xf32>
    %44 = math.exp %43 : vector<8x4xf32>
    %cst_23 = arith.constant 1.000000e+00 : f32
    %45 = vector.broadcast %cst_23 : f32 to vector<8x4xf32>
    %46 = arith.addf %45, %44 : vector<8x4xf32>
    %47 = arith.divf %45, %46 : vector<8x4xf32>
    %48 = vector.extract_strided_slice %41 {offsets = [8, 0], sizes = [8, 4], strides = [1, 1]} : vector<16x4xf32> to vector<8x4xf32>
    %49 = arith.negf %48 : vector<8x4xf32>
    %50 = math.exp %49 : vector<8x4xf32>
    %cst_24 = arith.constant 1.000000e+00 : f32
    %51 = vector.broadcast %cst_24 : f32 to vector<8x4xf32>
    %52 = arith.addf %51, %50 : vector<8x4xf32>
    %53 = arith.divf %51, %52 : vector<8x4xf32>
    %54 = arith.subf %53, %47 : vector<8x4xf32>
    %cst_25 = arith.constant 9.99999997E-7 : f32
    %55 = vector.broadcast %cst_25 : f32 to vector<8x4xf32>
    %56 = arith.divf %54, %55 : vector<8x4xf32>
    %c0_26 = arith.constant 0 : index
    %c0_27 = arith.constant 0 : index
    %57 = vector.load %arg5[%c0_26, %c0_27] : memref<8x4xf32, #tpu.memory_space<vmem>>, vector<8x4xf32>
    tpu.vector_store %arg5[%c0_26, %c0_27], %56 {strides = array<i32>} : memref<8x4xf32, #tpu.memory_space<vmem>>, vector<8x4xf32>,
    return
  }
  func.func @transform_0(%arg0: i32) -> (i32, i32) {
    %c0_i32 = arith.constant 0 : i32
    %c0_i32_0 = arith.constant 0 : i32
    return %arg0, %c0_i32 : i32, i32
  }
  func.func @transform_1(%arg0: i32) -> (i32, i32) {
    %c0_i32 = arith.constant 0 : i32
    %c0_i32_0 = arith.constant 0 : i32
    return %arg0, %c0_i32 : i32, i32
  }
  func.func @transform_2(%arg0: i32) -> (i32, i32) {
    %c0_i32 = arith.constant 0 : i32
    %c0_i32_0 = arith.constant 0 : i32
    %c0_i32_1 = arith.constant 0 : i32
    return %c0_i32, %c0_i32_0 : i32, i32
  }
  func.func @transform_3(%arg0: i32) -> (i32, i32) {
    %c0_i32 = arith.constant 0 : i32
    %c0_i32_0 = arith.constant 0 : i32
    %c0_i32_1 = arith.constant 0 : i32
    return %c0_i32, %c0_i32_0 : i32, i32
  }
  func.func @transform_4(%arg0: i32) -> (i32, i32) {
    %c0_i32 = arith.constant 0 : i32
    %c0_i32_0 = arith.constant 0 : i32
    return %arg0, %c0_i32 : i32, i32
  }
}

</mosaic_0001>

<llo_original>
// kernel: mul.3
$region0: #{mul.3}
  #allocation0 [shape = 's32[1]{0}', space=sflag, size = 0x4, scoped, tag = 'scoped memory for mul.3']
  %s0 = inlined_call_operand.vmem [shape: f32[1,16], index: 0, kind: input, shape index: {}, may-alias: {0,1}]
  %s1 = inlined_call_operand.vmem [shape: f32[1,16], index: 1, kind: input, shape index: {}, may-alias: {0,1}]
  %s2 = inlined_call_operand.vmem [shape: f32[1,16], index: 2, kind: output, shape index: {}]
  %v3 = vld [vmem:[%s0] sm:$0x1]
  %v4 = vld [vmem:[%s1] sm:$0x1]
  %5 = xla_tuple %v3, %v4
  %6 = xla_tuple %5
  %v7 = vmul.f32 %v3, %v4
  %8 = xla_tuple %v7
  %9 = vst [vmem:[%s2] sm:$0x1] %v7

// kernel: mul.4
$region0: #{mul.4}
  #allocation0 [shape = 's32[1]{0}', space=sflag, size = 0x4, scoped, tag = 'scoped memory for mul.4']
  %s0 = inlined_call_operand.vmem [shape: f32[32,32], index: 0, kind: input, shape index: {}, may-alias: {0,1}]
  %s1 = inlined_call_operand.vmem [shape: f32[32,32], index: 1, kind: input, shape index: {}, may-alias: {0,1}]
  %s2 = inlined_call_operand.vmem [shape: f32[32,32], index: 2, kind: output, shape index: {}]
  %v3 = vld [vmem:[%s0] sm:$0xff]
  %v4 = vld [vmem:[%s1] sm:$0xff]
  %5 = xla_tuple %v3, %v4
  %6 = xla_tuple %5
  %v7 = vmul.f32 %v3, %v4
  %8 = xla_tuple %v7
  %9 = vst [vmem:[%s2] sm:$0xff] %v7
  %s10 = scalar_lea.vmem %s0, 8
  %v11 = vld [vmem:[%s10] sm:$0xff]
  %s12 = scalar_lea.vmem %s1, 8
  %v13 = vld [vmem:[%s12] sm:$0xff]
  %14 = xla_tuple %v11, %v13
  %15 = xla_tuple %14
  %v16 = vmul.f32 %v11, %v13
  %17 = xla_tuple %v16
  %s18 = scalar_lea.vmem %s2, 8
  %19 = vst [vmem:[%s18] sm:$0xff] %v16
  %s20 = scalar_lea.vmem %s0, 16
  %v21 = vld [vmem:[%s20] sm:$0xff]
  %s22 = scalar_lea.vmem %s1, 16
  %v23 = vld [vmem:[%s22] sm:$0xff]
  %24 = xla_tuple %v21, %v23
  %25 = xla_tuple %24
  %v26 = vmul.f32 %v21, %v23
  %27 = xla_tuple %v26
  %s28 = scalar_lea.vmem %s2, 16
  %29 = vst [vmem:[%s28] sm:$0xff] %v26
  %s30 = scalar_lea.vmem %s0, 24
  %v31 = vld [vmem:[%s30] sm:$0xff]
  %s32 = scalar_lea.vmem %s1, 24
  %v33 = vld [vmem:[%s32] sm:$0xff]
  %34 = xla_tuple %v31, %v33
  %35 = xla_tuple %34
  %v36 = vmul.f32 %v31, %v33
  %37 = xla_tuple %v36
  %s38 = scalar_lea.vmem %s2, 24
  %39 = vst [vmem:[%s38] sm:$0xff] %v36

// kernel: mul.5
$region0: #{mul.5}
  #allocation0 [shape = 's32[1]{0}', space=sflag, size = 0x4, scoped, tag = 'scoped memory for mul.5']
  %s0 = inlined_call_operand.vmem [shape: f32[32,1], index: 0, kind: input, shape index: {}, may-alias: {0,1}]
  %s1 = inlined_call_operand.vmem [shape: f32[32,1], index: 1, kind: input, shape index: {}, may-alias: {0,1}]
  %s2 = inlined_call_operand.vmem [shape: f32[32,1], index: 2, kind: output, shape index: {}]
  %v3 = vld [vmem:[%s0] sm:$0x1]
  %v4 = vld [vmem:[%s1] sm:$0x1]
  %5 = xla_tuple %v3, %v4
  %6 = xla_tuple %5
  %v7 = vmul.f32 %v3, %v4
  %8 = xla_tuple %v7
  %9 = vst [vmem:[%s2] sm:$0x1] %v7

// kernel: survival_net_forward.1
$region0: #{survival_net_forward.1}
  #allocation0 [shape = 'u32[]', space=smem, size = 0x4, offset = 0x4, fixed_abs, tag = 'smem constant byte address 0x4 - core index']
  #allocation1 [shape = 'u32[144,128]{1,0:T(1,128)}', space=vmem, size = 0x12000, scoped, tag = 'internal scratch']
  %s0 = inlined_call_operand.vmem [shape: f32[8,32], index: 0, kind: input, shape index: {}]
  %s1 = inlined_call_operand.vmem [shape: f32[8,8], index: 1, kind: input, shape index: {}]
  %s2 = inlined_call_operand.vmem [shape: f32[456,128], index: 2, kind: input, shape index: {}]
  %s3 = inlined_call_operand.vmem [shape: f32[129,4], index: 3, kind: input, shape index: {}]
  %s4 = inlined_call_operand.vmem [shape: f32[8,4], index: 4, kind: output, shape index: {}]
  %s5 = sld [smem:[#allocation0]]
  $region26: #{survival_net_forward.1} parent=0
    _
  %s7 = ssub.s32 1, %s5
  %s8 = scalar_select 0, %s7, %s5
  // Predicated region
  $region2: #{survival_net_forward.1} parent=0 // pred_check
    _
  $region3: #{survival_net_forward.1} parent=0 // pred_check_branch
    %10 = sbr.rel (0) target = $region5
  $region4: #{survival_net_forward.1} parent=0 // pred_region
    _
  $region5: #{survival_net_forward.1} parent=0 // pred_fallthru
    _
  // Predicated region
  $region6: #{survival_net_forward.1} parent=0 // pred_check
    _
  $region7: #{survival_net_forward.1} parent=0 // pred_check_branch
    %12 = sbr.rel (0) target = $region9
  $region8: #{survival_net_forward.1} parent=0 // pred_region
    _
  $region9: #{survival_net_forward.1} parent=0 // pred_fallthru
    _
  // Predicated region
  $region10: #{survival_net_forward.1} parent=0 // pred_check
    _
  $region11: #{survival_net_forward.1} parent=0 // pred_check_branch
    %14 = sbr.rel (0) target = $region13
  $region12: #{survival_net_forward.1} parent=0 // pred_region
    _
  $region13: #{survival_net_forward.1} parent=0 // pred_fallthru
    _
  // Predicated region
  $region14: #{survival_net_forward.1} parent=0 // pred_check
    _
  $region15: #{survival_net_forward.1} parent=0 // pred_check_branch
    %16 = sbr.rel (0) target = $region17
  $region16: #{survival_net_forward.1} parent=0 // pred_region
    _
  $region17: #{survival_net_forward.1} parent=0 // pred_fallthru
    _
  %v17 = vld [vmem:[%s0] sm:$0xff]
  %v18 = vld [vmem:[%s1] sm:$0xff]
  %v19 = vld [vmem:[%s2] sm:$0xff]
  %v20 = vld [vmem:[%s2 + $0x8] sm:$0xff]
  %v21 = vld [vmem:[%s2 + $0x10] sm:$0xff]
  %v22 = vld [vmem:[%s2 + $0x18] sm:$0xff]
  %v23 = vld [vmem:[%s2 + $0x20] sm:$0x1]
  %v24 = vld [vmem:[%s2 + $0x28] sm:$0xff]
  %v25 = vld [vmem:[%s2 + $0x30] sm:$0xff]
  %v26 = vld [vmem:[%s2 + $0x38] sm:$0xff]
  %v27 = vld [vmem:[%s2 + $0x40] sm:$0xff]
  %v28 = vld [vmem:[%s2 + $0x48] sm:$0xff]
  %v29 = vld [vmem:[%s2 + $0x50] sm:$0xff]
  %v30 = vld [vmem:[%s2 + $0x58] sm:$0xff]
  %v31 = vld [vmem:[%s2 + $0x60] sm:$0xff]
  %v32 = vld [vmem:[%s2 + $0x68] sm:$0xff]
  %v33 = vld [vmem:[%s2 + $0x70] sm:$0xff]
  %v34 = vld [vmem:[%s2 + $0x78] sm:$0xff]
  %v35 = vld [vmem:[%s2 + $0x80] sm:$0xff]
  %v36 = vld [vmem:[%s2 + $0x88] sm:$0xff]
  %v37 = vld [vmem:[%s2 + $0x90] sm:$0xff]
  %v38 = vld [vmem:[%s2 + $0x98] sm:$0xff]
  %v39 = vld [vmem:[%s2 + $0xa0] sm:$0xff]
  %v40 = vld [vmem:[%s2 + $0xa8] sm:$0x1]
  %v41 = vld [vmem:[%s2 + $0xb0] sm:$0xff]
  %v42 = vld [vmem:[%s2 + $0xb8] sm:$0x1]
  %v43 = vld [vmem:[%s2 + $0xc0] sm:$0xff]
  %v44 = vld [vmem:[%s2 + $0xc8] sm:$0xff]
  %v45 = vld [vmem:[%s2 + $0xd0] sm:$0xff]
  %v46 = vld [vmem:[%s2 + $0xd8] sm:$0xff]
  %v47 = vld [vmem:[%s2 + $0xe0] sm:$0xff]
  %v48 = vld [vmem:[%s2 + $0xe8] sm:$0xff]
  %v49 = vld [vmem:[%s2 + $0xf0] sm:$0xff]
  %v50 = vld [vmem:[%s2 + $0xf8] sm:$0xff]
  %v51 = vld [vmem:[%s2 + $0x100] sm:$0xff]
  %v52 = vld [vmem:[%s2 + $0x108] sm:$0xff]
  %v53 = vld [vmem:[%s2 + $0x110] sm:$0xff]
  %v54 = vld [vmem:[%s2 + $0x118] sm:$0xff]
  %v55 = vld [vmem:[%s2 + $0x120] sm:$0xff]
  %v56 = vld [vmem:[%s2 + $0x128] sm:$0xff]
  %v57 = vld [vmem:[%s2 + $0x130] sm:$0xff]
  %v58 = vld [vmem:[%s2 + $0x138] sm:$0xff]
  %v59 = vld [vmem:[%s2 + $0x140] sm:$0xff]
  %v60 = vld [vmem:[%s2 + $0x148] sm:$0xff]
  %v61 = vld [vmem:[%s2 + $0x150] sm:$0xff]
  %v62 = vld [vmem:[%s2 + $0x158] sm:$0xff]
  %v63 = vld [vmem:[%s2 + $0x160] sm:$0xff]
  %v64 = vld [vmem:[%s2 + $0x168] sm:$0xff]
  %v65 = vld [vmem:[%s2 + $0x170] sm:$0xff]
  %v66 = vld [vmem:[%s2 + $0x178] sm:$0xff]
  %v67 = vld [vmem:[%s2 + $0x180] sm:$0xff]
  %v68 = vld [vmem:[%s2 + $0x188] sm:$0xff]
  %v69 = vld [vmem:[%s2 + $0x190] sm:$0xff]
  %v70 = vld [vmem:[%s2 + $0x198] sm:$0xff]
  %v71 = vld [vmem:[%s2 + $0x1a0] sm:$0xff]
  %v72 = vld [vmem:[%s2 + $0x1a8] sm:$0xff]
  %v73 = vld [vmem:[%s2 + $0x1b0] sm:$0xff]
  %v74 = vld [vmem:[%s2 + $0x1b8] sm:$0xff]
  %v75 = vld [vmem:[%s2 + $0x1c0] sm:$0x1]
  %v76 = vld [vmem:[%s3] sm:$0xff]
  %v77 = vld [vmem:[%s3 + $0x8] sm:$0xff]
  %v78 = vld [vmem:[%s3 + $0x10] sm:$0xff]
  %v79 = vld [vmem:[%s3 + $0x18] sm:$0xff]
  %v80 = vld [vmem:[%s3 + $0x20] sm:$0xff]
  %v81 = vld [vmem:[%s3 + $0x28] sm:$0xff]
  %v82 = vld [vmem:[%s3 + $0x30] sm:$0xff]
  %v83 = vld [vmem:[%s3 + $0x38] sm:$0xff]
  %v84 = vld [vmem:[%s3 + $0x40] sm:$0xff]
  %v85 = vld [vmem:[%s3 + $0x48] sm:$0xff]
  %v86 = vld [vmem:[%s3 + $0x50] sm:$0xff]
  %v87 = vld [vmem:[%s3 + $0x58] sm:$0xff]
  %v88 = vld [vmem:[%s3 + $0x60] sm:$0xff]
  %v89 = vld [vmem:[%s3 + $0x68] sm:$0xff]
  %v90 = vld [vmem:[%s3 + $0x70] sm:$0xff]
  %v91 = vld [vmem:[%s3 + $0x78] sm:$0xff]
  %v92 = vld [vmem:[%s3 + $0x80] sm:$0x1]
  %v93 = vlaneseq
  %v94 = vshrl.u32 %v93, 7
  %v95 = vsub.s32 0, %v94
  %v96 = vrot.slane %v23, %v95
  %vm97 = vcmask 261120
  %v99 = vsel %vm97, %v17, 0
  %101 = vmatprep.subr.mxu0 0.0
  %102 = vmatpush1.msra.mxu0 0.0
  %103 = vmatprep.subr.mxu0 0.0
  %104 = vmatpush1.msra.mxu0 0.0
  %105 = vmatprep.subr.mxu0 0.0
  %106 = vmatpush1.msra.mxu0 0.0
  %107 = vmatprep.subr.mxu0 0.0
  %108 = vmatpush1.msra.mxu0 0.0
  %109 = vmatprep.subr.mxu0 0.0
  %110 = vmatpush1.msra.mxu0 0.0
  %111 = vmatprep.subr.mxu0 0.0
  %112 = vmatpush1.msra.mxu0 0.0
  %113 = vmatprep.subr.mxu0 0.0
  %114 = vmatpush1.msra.mxu0 0.0
  %115 = vmatprep.subr.mxu0 0.0
  %116 = vmatpush1.msra.mxu0 0.0
  %117 = vmatprep.subr.mxu0 0.0
  %118 = vmatpush1.msra.mxu0 0.0
  %119 = vmatprep.subr.mxu0 0.0
  %120 = vmatpush1.msra.mxu0 0.0
  %121 = vmatprep.subr.mxu0 0.0
  %122 = vmatpush1.msra.mxu0 0.0
  %123 = vmatprep.subr.mxu0 0.0
  %124 = vmatpush1.msra.mxu0 0.0
  %125 = vmatprep.subr.mxu0 0.0
  %126 = vmatpush1.msra.mxu0 %v22
  %127 = vmatprep.subr.mxu0 0.0
  %128 = vmatpush1.msra.mxu0 %v21
  %129 = vmatprep.subr.mxu0 0.0
  %130 = vmatpush1.msra.mxu0 %v20
  %131 = vmatprep.subr.mxu0 0.0
  %132 = vmatpush1.msra.mxu0 %v19
  %133 = vmatprep.subr.mxu0 0.0
  %134 = vmatpush2.msra.mxu0 0.0
  %135 = vmatprep.subr.mxu0 0.0
  %136 = vmatpush2.msra.mxu0 0.0
  %137 = vmatprep.subr.mxu0 0.0
  %138 = vmatpush2.msra.mxu0 0.0
  %139 = vmatprep.subr.mxu0 0.0
  %140 = vmatpush2.msra.mxu0 0.0
  %141 = vmatprep.subr.mxu0 0.0
  %142 = vmatpush2.msra.mxu0 0.0
  %143 = vmatprep.subr.mxu0 0.0
  %144 = vmatpush2.msra.mxu0 0.0
  %145 = vmatprep.subr.mxu0 0.0
  %146 = vmatpush2.msra.mxu0 0.0
  %147 = vmatprep.subr.mxu0 0.0
  %148 = vmatpush2.msra.mxu0 0.0
  %149 = vmatprep.subr.mxu0 0.0
  %150 = vmatpush2.msra.mxu0 0.0
  %151 = vmatprep.subr.mxu0 0.0
  %152 = vmatpush2.msra.mxu0 0.0
  %153 = vmatprep.subr.mxu0 0.0
  %154 = vmatpush2.msra.mxu0 0.0
  %155 = vmatprep.subr.mxu0 0.0
  %156 = vmatpush2.msra.mxu0 0.0
  %157 = vmatprep.subr.mxu0 0.0
  %158 = vmatpush2.msra.mxu0 0.0
  %159 = vmatprep.subr.mxu0 0.0
  %160 = vmatpush2.msra.mxu0 0.0
  %161 = vmatprep.subr.mxu0 0.0
  %162 = vmatpush2.msra.mxu0 0.0
  %163 = vmatprep.subr.mxu0 0.0
  %164 = vmatpush2.msra.mxu0 0.0
  %165 = vmatprep.mubr.f32.mxu0 0.0
  %166 = vmatmul.mubr.f32.gmra.mxu0 %v99
  %v167 = vpop.f32.mrf.mxu0
  %v168 = vadd.f32 %v96, %v167
  %v169 = vpop.f32.mrf.mxu0
  %170 = vdwg.mxu0
  %v171 = vtanh.pop %v168
  %v172 = vlaneseq
  %v173 = vshrl.u32 %v172, 7
  %v174 = vsub.s32 0, %v173
  %v175 = vrot.slane %v40, %v174
  %176 = vmatprep.subr.mxu0 0.0
  %177 = vmatpush1.msra.mxu0 %v39
  %178 = vmatprep.subr.mxu0 0.0
  %179 = vmatpush1.msra.mxu0 %v38
  %180 = vmatprep.subr.mxu0 0.0
  %181 = vmatpush1.msra.mxu0 %v37
  %182 = vmatprep.subr.mxu0 0.0
  %183 = vmatpush1.msra.mxu0 %v36
  %184 = vmatprep.subr.mxu0 0.0
  %185 = vmatpush1.msra.mxu0 %v35
  %186 = vmatprep.subr.mxu0 0.0
  %187 = vmatpush1.msra.mxu0 %v34
  %188 = vmatprep.subr.mxu0 0.0
  %189 = vmatpush1.msra.mxu0 %v33
  %190 = vmatprep.subr.mxu0 0.0
  %191 = vmatpush1.msra.mxu0 %v32
  %192 = vmatprep.subr.mxu0 0.0
  %193 = vmatpush1.msra.mxu0 %v31
  %194 = vmatprep.subr.mxu0 0.0
  %195 = vmatpush1.msra.mxu0 %v30
  %196 = vmatprep.subr.mxu0 0.0
  %197 = vmatpush1.msra.mxu0 %v29
  %198 = vmatprep.subr.mxu0 0.0
  %199 = vmatpush1.msra.mxu0 %v28
  %200 = vmatprep.subr.mxu0 0.0
  %201 = vmatpush1.msra.mxu0 %v27
  %202 = vmatprep.subr.mxu0 0.0
  %203 = vmatpush1.msra.mxu0 %v26
  %204 = vmatprep.subr.mxu0 0.0
  %205 = vmatpush1.msra.mxu0 %v25
  %206 = vmatprep.subr.mxu0 0.0
  %207 = vmatpush1.msra.mxu0 %v24
  %208 = vmatprep.subr.mxu0 0.0
  %209 = vmatpush2.msra.mxu0 0.0
  %210 = vmatprep.subr.mxu0 0.0
  %211 = vmatpush2.msra.mxu0 0.0
  %212 = vmatprep.subr.mxu0 0.0
  %213 = vmatpush2.msra.mxu0 0.0
  %214 = vmatprep.subr.mxu0 0.0
  %215 = vmatpush2.msra.mxu0 0.0
  %216 = vmatprep.subr.mxu0 0.0
  %217 = vmatpush2.msra.mxu0 0.0
  %218 = vmatprep.subr.mxu0 0.0
  %219 = vmatpush2.msra.mxu0 0.0
  %220 = vmatprep.subr.mxu0 0.0
  %221 = vmatpush2.msra.mxu0 0.0
  %222 = vmatprep.subr.mxu0 0.0
  %223 = vmatpush2.msra.mxu0 0.0
  %224 = vmatprep.subr.mxu0 0.0
  %225 = vmatpush2.msra.mxu0 0.0
  %226 = vmatprep.subr.mxu0 0.0
  %227 = vmatpush2.msra.mxu0 0.0
  %228 = vmatprep.subr.mxu0 0.0
  %229 = vmatpush2.msra.mxu0 0.0
  %230 = vmatprep.subr.mxu0 0.0
  %231 = vmatpush2.msra.mxu0 0.0
  %232 = vmatprep.subr.mxu0 0.0
  %233 = vmatpush2.msra.mxu0 0.0
  %234 = vmatprep.subr.mxu0 0.0
  %235 = vmatpush2.msra.mxu0 0.0
  %236 = vmatprep.subr.mxu0 0.0
  %237 = vmatpush2.msra.mxu0 0.0
  %238 = vmatprep.subr.mxu0 0.0
  %239 = vmatpush2.msra.mxu0 0.0
  %240 = vmatprep.mubr.f32.mxu0 0.0
  %241 = vmatmul.mubr.f32.gmra.mxu0 %v171
  %v242 = vpop.f32.mrf.mxu0
  %v243 = vadd.f32 %v175, %v242
  %v244 = vpop.f32.mrf.mxu0
  %245 = vdwg.mxu0
  %v246 = vtanh.pop %v243
  %v247 = vadd.f32 %v171, %v246
  %v248 = vlaneseq
  %v249 = vshrl.u32 %v248, 7
  %v250 = vsub.s32 0, %v249
  %v251 = vrot.slane %v42, %v250
  %252 = vmatprep.subr.mxu0 0.0
  %253 = vmatpush1.msra.mxu0 %v58
  %254 = vmatprep.subr.mxu0 0.0
  %255 = vmatpush1.msra.mxu0 %v57
  %256 = vmatprep.subr.mxu0 0.0
  %257 = vmatpush1.msra.mxu0 %v56
  %258 = vmatprep.subr.mxu0 0.0
  %259 = vmatpush1.msra.mxu0 %v55
  %260 = vmatprep.subr.mxu0 0.0
  %261 = vmatpush1.msra.mxu0 %v54
  %262 = vmatprep.subr.mxu0 0.0
  %263 = vmatpush1.msra.mxu0 %v53
  %264 = vmatprep.subr.mxu0 0.0
  %265 = vmatpush1.msra.mxu0 %v52
  %266 = vmatprep.subr.mxu0 0.0
  %267 = vmatpush1.msra.mxu0 %v51
  %268 = vmatprep.subr.mxu0 0.0
  %269 = vmatpush1.msra.mxu0 %v50
  %270 = vmatprep.subr.mxu0 0.0
  %271 = vmatpush1.msra.mxu0 %v49
  %272 = vmatprep.subr.mxu0 0.0
  %273 = vmatpush1.msra.mxu0 %v48
  %274 = vmatprep.subr.mxu0 0.0
  %275 = vmatpush1.msra.mxu0 %v47
  %276 = vmatprep.subr.mxu0 0.0
  %277 = vmatpush1.msra.mxu0 %v46
  %278 = vmatprep.subr.mxu0 0.0
  %279 = vmatpush1.msra.mxu0 %v45
  %280 = vmatprep.subr.mxu0 0.0
  %281 = vmatpush1.msra.mxu0 %v44
  %282 = vmatprep.subr.mxu0 0.0
  %283 = vmatpush1.msra.mxu0 %v43
  %284 = vmatprep.subr.mxu0 0.0
  %285 = vmatpush2.msra.mxu0 0.0
  %286 = vmatprep.subr.mxu0 0.0
  %287 = vmatpush2.msra.mxu0 0.0
  %288 = vmatprep.subr.mxu0 0.0
  %289 = vmatpush2.msra.mxu0 0.0
  %290 = vmatprep.subr.mxu0 0.0
  %291 = vmatpush2.msra.mxu0 0.0
  %292 = vmatprep.subr.mxu0 0.0
  %293 = vmatpush2.msra.mxu0 0.0
  %294 = vmatprep.subr.mxu0 0.0
  %295 = vmatpush2.msra.mxu0 0.0
  %296 = vmatprep.subr.mxu0 0.0
  %297 = vmatpush2.msra.mxu0 0.0
  %298 = vmatprep.subr.mxu0 0.0
  %299 = vmatpush2.msra.mxu0 0.0
  %300 = vmatprep.subr.mxu0 0.0
  %301 = vmatpush2.msra.mxu0 0.0
  %302 = vmatprep.subr.mxu0 0.0
  %303 = vmatpush2.msra.mxu0 0.0
  %304 = vmatprep.subr.mxu0 0.0
  %305 = vmatpush2.msra.mxu0 0.0
  %306 = vmatprep.subr.mxu0 0.0
  %307 = vmatpush2.msra.mxu0 0.0
  %308 = vmatprep.subr.mxu0 0.0
  %309 = vmatpush2.msra.mxu0 0.0
  %310 = vmatprep.subr.mxu0 0.0
  %311 = vmatpush2.msra.mxu0 0.0
  %312 = vmatprep.subr.mxu0 0.0
  %313 = vmatpush2.msra.mxu0 0.0
  %314 = vmatprep.subr.mxu0 0.0
  %315 = vmatpush2.msra.mxu0 0.0
  %316 = vmatprep.mubr.f32.mxu0 0.0
  %317 = vmatmul.mubr.f32.gmra.mxu0 %v247
  %v318 = vpop.f32.mrf.mxu0
  %v319 = vadd.f32 %v251, %v318
  %v320 = vpop.f32.mrf.mxu0
  %321 = vdwg.mxu0
  %v322 = vadd.f32 %v18, 1e-06
  %vm323 = vcmask 64512
  %v325 = vsel %vm323, %v18, 0
  %327 = vmatprep.subr.mxu0 0.0
  %328 = vmatpush1.msra.mxu0 0.0
  %329 = vmatprep.subr.mxu0 0.0
  %330 = vmatpush1.msra.mxu0 0.0
  %331 = vmatprep.subr.mxu0 0.0
  %332 = vmatpush1.msra.mxu0 0.0
  %333 = vmatprep.subr.mxu0 0.0
  %334 = vmatpush1.msra.mxu0 0.0
  %335 = vmatprep.subr.mxu0 0.0
  %336 = vmatpush1.msra.mxu0 0.0
  %337 = vmatprep.subr.mxu0 0.0
  %338 = vmatpush1.msra.mxu0 0.0
  %339 = vmatprep.subr.mxu0 0.0
  %340 = vmatpush1.msra.mxu0 0.0
  %341 = vmatprep.subr.mxu0 0.0
  %342 = vmatpush1.msra.mxu0 0.0
  %343 = vmatprep.subr.mxu0 0.0
  %344 = vmatpush1.msra.mxu0 0.0
  %345 = vmatprep.subr.mxu0 0.0
  %346 = vmatpush1.msra.mxu0 0.0
  %347 = vmatprep.subr.mxu0 0.0
  %348 = vmatpush1.msra.mxu0 0.0
  %349 = vmatprep.subr.mxu0 0.0
  %350 = vmatpush1.msra.mxu0 0.0
  %351 = vmatprep.subr.mxu0 0.0
  %352 = vmatpush1.msra.mxu0 0.0
  %353 = vmatprep.subr.mxu0 0.0
  %354 = vmatpush1.msra.mxu0 0.0
  %355 = vmatprep.subr.mxu0 0.0
  %356 = vmatpush1.msra.mxu0 0.0
  %357 = vmatprep.subr.mxu0 0.0
  %358 = vmatpush1.msra.mxu0 %v41
  %359 = vmatprep.subr.mxu0 0.0
  %360 = vmatpush2.msra.mxu0 0.0
  %361 = vmatprep.subr.mxu0 0.0
  %362 = vmatpush2.msra.mxu0 0.0
  %363 = vmatprep.subr.mxu0 0.0
  %364 = vmatpush2.msra.mxu0 0.0
  %365 = vmatprep.subr.mxu0 0.0
  %366 = vmatpush2.msra.mxu0 0.0
  %367 = vmatprep.subr.mxu0 0.0
  %368 = vmatpush2.msra.mxu0 0.0
  %369 = vmatprep.subr.mxu0 0.0
  %370 = vmatpush2.msra.mxu0 0.0
  %371 = vmatprep.subr.mxu0 0.0
  %372 = vmatpush2.msra.mxu0 0.0
  %373 = vmatprep.subr.mxu0 0.0
  %374 = vmatpush2.msra.mxu0 0.0
  %375 = vmatprep.subr.mxu0 0.0
  %376 = vmatpush2.msra.mxu0 0.0
  %377 = vmatprep.subr.mxu0 0.0
  %378 = vmatpush2.msra.mxu0 0.0
  %379 = vmatprep.subr.mxu0 0.0
  %380 = vmatpush2.msra.mxu0 0.0
  %381 = vmatprep.subr.mxu0 0.0
  %382 = vmatpush2.msra.mxu0 0.0
  %383 = vmatprep.subr.mxu0 0.0
  %384 = vmatpush2.msra.mxu0 0.0
  %385 = vmatprep.subr.mxu0 0.0
  %386 = vmatpush2.msra.mxu0 0.0
  %387 = vmatprep.subr.mxu0 0.0
  %388 = vmatpush2.msra.mxu0 0.0
  %389 = vmatprep.subr.mxu0 0.0
  %390 = vmatpush2.msra.mxu0 0.0
  %391 = vmatprep.mubr.f32.mxu0 0.0
  %392 = vmatmul.mubr.f32.gmra.mxu0 %v325
  %v393 = vpop.f32.mrf.mxu0
  %v394 = vadd.f32 %v319, %v393
  %v395 = vpop.f32.mrf.mxu0
  %396 = vdwg.mxu0
  %v397 = vtanh.pop %v394
  %v399 = vsel %vm323, %v322, 0
  %401 = vmatprep.subr.mxu0 0.0
  %402 = vmatpush1.msra.mxu0 0.0
  %403 = vmatprep.subr.mxu0 0.0
  %404 = vmatpush1.msra.mxu0 0.0
  %405 = vmatprep.subr.mxu0 0.0
  %406 = vmatpush1.msra.mxu0 0.0
  %407 = vmatprep.subr.mxu0 0.0
  %408 = vmatpush1.msra.mxu0 0.0
  %409 = vmatprep.subr.mxu0 0.0
  %410 = vmatpush1.msra.mxu0 0.0
  %411 = vmatprep.subr.mxu0 0.0
  %412 = vmatpush1.msra.mxu0 0.0
  %413 = vmatprep.subr.mxu0 0.0
  %414 = vmatpush1.msra.mxu0 0.0
  %415 = vmatprep.subr.mxu0 0.0
  %416 = vmatpush1.msra.mxu0 0.0
  %417 = vmatprep.subr.mxu0 0.0
  %418 = vmatpush1.msra.mxu0 0.0
  %419 = vmatprep.subr.mxu0 0.0
  %420 = vmatpush1.msra.mxu0 0.0
  %421 = vmatprep.subr.mxu0 0.0
  %422 = vmatpush1.msra.mxu0 0.0
  %423 = vmatprep.subr.mxu0 0.0
  %424 = vmatpush1.msra.mxu0 0.0
  %425 = vmatprep.subr.mxu0 0.0
  %426 = vmatpush1.msra.mxu0 0.0
  %427 = vmatprep.subr.mxu0 0.0
  %428 = vmatpush1.msra.mxu0 0.0
  %429 = vmatprep.subr.mxu0 0.0
  %430 = vmatpush1.msra.mxu0 0.0
  %431 = vmatprep.subr.mxu0 0.0
  %432 = vmatpush1.msra.mxu0 %v41
  %433 = vmatprep.subr.mxu0 0.0
  %434 = vmatpush2.msra.mxu0 0.0
  %435 = vmatprep.subr.mxu0 0.0
  %436 = vmatpush2.msra.mxu0 0.0
  %437 = vmatprep.subr.mxu0 0.0
  %438 = vmatpush2.msra.mxu0 0.0
  %439 = vmatprep.subr.mxu0 0.0
  %440 = vmatpush2.msra.mxu0 0.0
  %441 = vmatprep.subr.mxu0 0.0
  %442 = vmatpush2.msra.mxu0 0.0
  %443 = vmatprep.subr.mxu0 0.0
  %444 = vmatpush2.msra.mxu0 0.0
  %445 = vmatprep.subr.mxu0 0.0
  %446 = vmatpush2.msra.mxu0 0.0
  %447 = vmatprep.subr.mxu0 0.0
  %448 = vmatpush2.msra.mxu0 0.0
  %449 = vmatprep.subr.mxu0 0.0
  %450 = vmatpush2.msra.mxu0 0.0
  %451 = vmatprep.subr.mxu0 0.0
  %452 = vmatpush2.msra.mxu0 0.0
  %453 = vmatprep.subr.mxu0 0.0
  %454 = vmatpush2.msra.mxu0 0.0
  %455 = vmatprep.subr.mxu0 0.0
  %456 = vmatpush2.msra.mxu0 0.0
  %457 = vmatprep.subr.mxu0 0.0
  %458 = vmatpush2.msra.mxu0 0.0
  %459 = vmatprep.subr.mxu0 0.0
  %460 = vmatpush2.msra.mxu0 0.0
  %461 = vmatprep.subr.mxu0 0.0
  %462 = vmatpush2.msra.mxu0 0.0
  %463 = vmatprep.subr.mxu0 0.0
  %464 = vmatpush2.msra.mxu0 0.0
  %465 = vmatprep.mubr.f32.mxu0 0.0
  %466 = vmatmul.mubr.f32.gmra.mxu0 %v399
  %v467 = vpop.f32.mrf.mxu0
  %v468 = vadd.f32 %v319, %v467
  %v469 = vpop.f32.mrf.mxu0
  %470 = vdwg.mxu0
  %v471 = vtanh.pop %v468
  %v472 = vlaneseq
  %v473 = vshrl.u32 %v472, 7
  %v474 = vsub.s32 0, %v473
  %v475 = vrot.slane %v75, %v474
  %476 = vmatprep.subr.mxu0 0.0
  %477 = vmatpush1.msra.mxu0 %v74
  %478 = vmatprep.subr.mxu0 0.0
  %479 = vmatpush1.msra.mxu0 %v73
  %480 = vmatprep.subr.mxu0 0.0
  %481 = vmatpush1.msra.mxu0 %v72
  %482 = vmatprep.subr.mxu0 0.0
  %483 = vmatpush1.msra.mxu0 %v71
  %484 = vmatprep.subr.mxu0 0.0
  %485 = vmatpush1.msra.mxu0 %v70
  %486 = vmatprep.subr.mxu0 0.0
  %487 = vmatpush1.msra.mxu0 %v69
  %488 = vmatprep.subr.mxu0 0.0
  %489 = vmatpush1.msra.mxu0 %v68
  %490 = vmatprep.subr.mxu0 0.0
  %491 = vmatpush1.msra.mxu0 %v67
  %492 = vmatprep.subr.mxu0 0.0
  %493 = vmatpush1.msra.mxu0 %v66
  %494 = vmatprep.subr.mxu0 0.0
  %495 = vmatpush1.msra.mxu0 %v65
  %496 = vmatprep.subr.mxu0 0.0
  %497 = vmatpush1.msra.mxu0 %v64
  %498 = vmatprep.subr.mxu0 0.0
  %499 = vmatpush1.msra.mxu0 %v63
  %500 = vmatprep.subr.mxu0 0.0
  %501 = vmatpush1.msra.mxu0 %v62
  %502 = vmatprep.subr.mxu0 0.0
  %503 = vmatpush1.msra.mxu0 %v61
  %504 = vmatprep.subr.mxu0 0.0
  %505 = vmatpush1.msra.mxu0 %v60
  %506 = vmatprep.subr.mxu0 0.0
  %507 = vmatpush1.msra.mxu0 %v59
  %508 = vmatprep.subr.mxu0 0.0
  %509 = vmatpush2.msra.mxu0 0.0
  %510 = vmatprep.subr.mxu0 0.0
  %511 = vmatpush2.msra.mxu0 0.0
  %512 = vmatprep.subr.mxu0 0.0
  %513 = vmatpush2.msra.mxu0 0.0
  %514 = vmatprep.subr.mxu0 0.0
  %515 = vmatpush2.msra.mxu0 0.0
  %516 = vmatprep.subr.mxu0 0.0
  %517 = vmatpush2.msra.mxu0 0.0
  %518 = vmatprep.subr.mxu0 0.0
  %519 = vmatpush2.msra.mxu0 0.0
  %520 = vmatprep.subr.mxu0 0.0
  %521 = vmatpush2.msra.mxu0 0.0
  %522 = vmatprep.subr.mxu0 0.0
  %523 = vmatpush2.msra.mxu0 0.0
  %524 = vmatprep.subr.mxu0 0.0
  %525 = vmatpush2.msra.mxu0 0.0
  %526 = vmatprep.subr.mxu0 0.0
  %527 = vmatpush2.msra.mxu0 0.0
  %528 = vmatprep.subr.mxu0 0.0
  %529 = vmatpush2.msra.mxu0 0.0
  %530 = vmatprep.subr.mxu0 0.0
  %531 = vmatpush2.msra.mxu0 0.0
  %532 = vmatprep.subr.mxu0 0.0
  %533 = vmatpush2.msra.mxu0 0.0
  %534 = vmatprep.subr.mxu0 0.0
  %535 = vmatpush2.msra.mxu0 0.0
  %536 = vmatprep.subr.mxu0 0.0
  %537 = vmatpush2.msra.mxu0 0.0
  %538 = vmatprep.subr.mxu0 0.0
  %539 = vmatpush2.msra.mxu0 0.0
  %540 = vmatprep.mubr.f32.mxu0 0.0
  %541 = vmatmul.mubr.f32.gmra.mxu0 %v397
  %v542 = vpop.f32.mrf.mxu0
  %v543 = vadd.f32 %v475, %v542
  %v544 = vpop.f32.mrf.mxu0
  %545 = vmatprep.mubr.f32.mxu0 0.0
  %546 = vmatmul.mubr.f32.gmra.mxu0 %v471
  %v547 = vpop.f32.mrf.mxu0
  %v548 = vadd.f32 %v475, %v547
  %v549 = vpop.f32.mrf.mxu0
  %550 = vdwg.mxu0
  %v551 = vtanh.pop %v543
  %v552 = vtanh.pop %v548
  %v553 = vadd.f32 %v397, %v551
  %v554 = vadd.f32 %v471, %v552
  %v555 = vlaneseq
  %v556 = vshrl.u32 %v555, 7
  %v557 = vsub.s32 0, %v556
  %v558 = vrot.slane %v92, %v557
  %559 = vmatprep.subr.mxu0 0.0
  %560 = vmatpush1.msra.mxu0 %v91
  %561 = vmatprep.subr.mxu0 0.0
  %562 = vmatpush1.msra.mxu0 %v90
  %563 = vmatprep.subr.mxu0 0.0
  %564 = vmatpush1.msra.mxu0 %v89
  %565 = vmatprep.subr.mxu0 0.0
  %566 = vmatpush1.msra.mxu0 %v88
  %567 = vmatprep.subr.mxu0 0.0
  %568 = vmatpush1.msra.mxu0 %v87
  %569 = vmatprep.subr.mxu0 0.0
  %570 = vmatpush1.msra.mxu0 %v86
  %571 = vmatprep.subr.mxu0 0.0
  %572 = vmatpush1.msra.mxu0 %v85
  %573 = vmatprep.subr.mxu0 0.0
  %574 = vmatpush1.msra.mxu0 %v84
  %575 = vmatprep.subr.mxu0 0.0
  %576 = vmatpush1.msra.mxu0 %v83
  %577 = vmatprep.subr.mxu0 0.0
  %578 = vmatpush1.msra.mxu0 %v82
  %579 = vmatprep.subr.mxu0 0.0
  %580 = vmatpush1.msra.mxu0 %v81
  %581 = vmatprep.subr.mxu0 0.0
  %582 = vmatpush1.msra.mxu0 %v80
  %583 = vmatprep.subr.mxu0 0.0
  %584 = vmatpush1.msra.mxu0 %v79
  %585 = vmatprep.subr.mxu0 0.0
  %586 = vmatpush1.msra.mxu0 %v78
  %587 = vmatprep.subr.mxu0 0.0
  %588 = vmatpush1.msra.mxu0 %v77
  %589 = vmatprep.subr.mxu0 0.0
  %590 = vmatpush1.msra.mxu0 %v76
  %591 = vmatprep.subr.mxu0 0.0
  %592 = vmatpush2.msra.mxu0 0.0
  %593 = vmatprep.subr.mxu0 0.0
  %594 = vmatpush2.msra.mxu0 0.0
  %595 = vmatprep.subr.mxu0 0.0
  %596 = vmatpush2.msra.mxu0 0.0
  %597 = vmatprep.subr.mxu0 0.0
  %598 = vmatpush2.msra.mxu0 0.0
  %599 = vmatprep.subr.mxu0 0.0
  %600 = vmatpush2.msra.mxu0 0.0
  %601 = vmatprep.subr.mxu0 0.0
  %602 = vmatpush2.msra.mxu0 0.0
  %603 = vmatprep.subr.mxu0 0.0
  %604 = vmatpush2.msra.mxu0 0.0
  %605 = vmatprep.subr.mxu0 0.0
  %606 = vmatpush2.msra.mxu0 0.0
  %607 = vmatprep.subr.mxu0 0.0
  %608 = vmatpush2.msra.mxu0 0.0
  %609 = vmatprep.subr.mxu0 0.0
  %610 = vmatpush2.msra.mxu0 0.0
  %611 = vmatprep.subr.mxu0 0.0
  %612 = vmatpush2.msra.mxu0 0.0
  %613 = vmatprep.subr.mxu0 0.0
  %614 = vmatpush2.msra.mxu0 0.0
  %615 = vmatprep.subr.mxu0 0.0
  %616 = vmatpush2.msra.mxu0 0.0
  %617 = vmatprep.subr.mxu0 0.0
  %618 = vmatpush2.msra.mxu0 0.0
  %619 = vmatprep.subr.mxu0 0.0
  %620 = vmatpush2.msra.mxu0 0.0
  %621 = vmatprep.subr.mxu0 0.0
  %622 = vmatpush2.msra.mxu0 0.0
  %623 = vmatprep.mubr.f32.mxu0 0.0
  %624 = vmatmul.mubr.f32.gmra.mxu0 %v553
  %v625 = vpop.f32.mrf.mxu0
  %v626 = vadd.f32 %v558, %v625
  %v627 = vpop.f32.mrf.mxu0
  %628 = vmatprep.mubr.f32.mxu0 0.0
  %629 = vmatmul.mubr.f32.gmra.mxu0 %v554
  %v630 = vpop.f32.mrf.mxu0
  %v631 = vadd.f32 %v558, %v630
  %v632 = vpop.f32.mrf.mxu0
  %633 = vdwg.mxu0
  %v634 = vxor.u32 %v626, 2147483648
  %v635 = vmul.f32 %v634, 1.442695
  %v636 = vpow.pop %v635
  %v637 = vadd.f32 %v636, 1.0
  %v638 = vrcp.pop %v637
  %v639 = vmul.f32 1.0, %v638
  %v640 = vxor.u32 %v631, 2147483648
  %v641 = vmul.f32 %v640, 1.442695
  %v642 = vpow.pop %v641
  %v643 = vadd.f32 %v642, 1.0
  %v644 = vrcp.pop %v643
  %v645 = vmul.f32 1.0, %v644
  %v646 = vsub.f32 %v645, %v639
  %v647 = vrcp.pop 1e-06
  %v648 = vmul.f32 %v646, %v647
  %vm649 = vcmask 31744
  %650 = vst.msk [vmem:[%s4] sm:$0xff] %vm649, %v648
  // Predicated region
  $region18: #{survival_net_forward.1} parent=0 // pred_check
    _
  $region19: #{survival_net_forward.1} parent=0 // pred_check_branch
    %652 = sbr.rel (0) target = $region21
  $region20: #{survival_net_forward.1} parent=0 // pred_region
    _
  $region21: #{survival_net_forward.1} parent=0 // pred_fallthru
    _
  // Predicated region
  $region22: #{survival_net_forward.1} parent=0 // pred_check
    _
  $region23: #{survival_net_forward.1} parent=0 // pred_check_branch
    %654 = sbr.rel (0) target = $region25
  $region24: #{survival_net_forward.1} parent=0 // pred_region
    _
  $region25: #{survival_net_forward.1} parent=0 // pred_fallthru
    _

</llo_original>
